<compile_context>
chip_gen: v5e
topology: v5e:2x2
jax: 0.10.0
libtpu: 0.0.40
codegen_flags: <defaults>
</compile_context>

<pallas_src>
import functools

import jax
import jax.numpy as jnp
from jax.experimental import pallas as pl
from jax.experimental.pallas import tpu as pltpu


def _round_up(x, m):
    return (x + m - 1) // m * m


def _pick_batch_tile(batch, length, max_lanes=4096):
    """Largest divisor Bt of `batch` keeping the lane slab Bt*L reasonable.

    Small problems -> one grid step (per-step overhead dominates there).
    Large batches -> several lane-aligned, independent ("parallel") grid
    steps that bound per-step VMEM and can feed both TensorCores on v7x.
    Prefers tiles whose lane width is already a multiple of 128 (no wasted
    padded lanes); otherwise the wrapper pads the lane axis.
    """
    if batch * length <= max_lanes:
        return batch
    fallback = None
    for d in range(batch, 0, -1):
        if batch % d != 0 or d * length > max_lanes:
            continue
        if (d * length) % 128 == 0:
            return d
        if fallback is None:
            fallback = d
    return fallback if fallback is not None else batch


def _conv1d_relu_kernel(x_ref, w_ref, mask_ref, o_ref, *, K, pad, use_mask):
    # x_ref:    (1, Cin_p, Nt_pad + 2*pad) lane-packed, halo-padded slab
    # w_ref:    (Cout_p, K*Cin_p)          tap-major fused conv weight
    # mask_ref: (K, 1, Nt_pad)             1.0 where tap k stays in its batch
    # o_ref:    (1, Cout_p, Nt_pad)        lane-dense output block
    x = x_ref[0]                                   # (Cin_p, Nt_pad + 2*pad)
    nt = o_ref.shape[2]

    # Build the im2col RHS from K shifted slices of the slab (K is static,
    # loop is unrolled), then issue ONE fused MXU matmul.
    taps = []
    for k in range(K):
        tap = x[:, k:k + nt]                       # shifted window (uses halo)
        if use_mask and k != pad:                  # boundary taps: kill values
            tap = tap * mask_ref[k]                # that crossed a batch edge
        taps.append(tap)
    rhs = jnp.concatenate(taps, axis=0)            # (K*Cin_p, Nt_pad)

    acc = jnp.dot(w_ref[...], rhs, preferred_element_type=jnp.float32)
    o_ref[0] = jnp.maximum(acc, 0.0).astype(o_ref.dtype)


def cnn_se_block_forward(x, weight, *, padding=1):
    """CNNSEBlock forward: relu(conv1d(x, weight)), stride=1, 'same' length.

    x:      (B, Cin, L)    float32 (PyTorch NCL layout)
    weight: (Cout, Cin, K) float32 (PyTorch Conv1d layout)
    """
    B, Cin, L = x.shape
    Cout, _, K = weight.shape
    pad = padding
    if K != 2 * pad + 1:
        raise ValueError("kernel assumes a 'same'-length conv: K == 2*pad + 1")

    Cin_p = _round_up(Cin, 8)        # sublane-align channel dims
    Cout_p = _round_up(Cout, 8)

    Bt = _pick_batch_tile(B, L)      # batch elements per grid step
    G = B // Bt                      # grid steps
    Nt = Bt * L                      # valid lanes per step
    Nt_pad = _round_up(Nt, 128)      # lane-dense (unmasked vst) output width
    Ntp = Nt_pad + 2 * pad

    # One fused relayout: (B, Cin, L) -> (G, Cin_p, Nt_pad + 2*pad), with the
    # conv halo + lane padding baked in as zero columns.
    xs = jnp.pad(x, ((0, 0), (0, Cin_p - Cin), (0, 0)))            # (B, Cin_p, L)
    xs = xs.reshape(G, Bt, Cin_p, L).transpose(0, 2, 1, 3)         # (G, Cin_p, Bt, L)
    xs = xs.reshape(G, Cin_p, Nt)
    xs = jnp.pad(xs, ((0, 0), (0, 0), (pad, Nt_pad - Nt + pad)))   # (G, Cin_p, Ntp)

    # Fused tap-major weight: w_fused[o, k*Cin_p + c] = W[o, c, k].
    wf = jnp.pad(weight, ((0, Cout_p - Cout), (0, Cin_p - Cin), (0, 0)))
    wf = wf.transpose(0, 2, 1).reshape(Cout_p, K * Cin_p)

    # Per-tap validity mask over the packed lane axis (zeroes contributions
    # that would cross an internal batch boundary inside the slab).  Only
    # needed when more than one batch element shares a slab.
    use_mask = Bt > 1
    lane_pos = jnp.tile(jnp.arange(L, dtype=jnp.int32), Bt)        # (Nt,)
    shifts = jnp.arange(K, dtype=jnp.int32)[:, None] - pad         # (K, 1)
    tap_pos = lane_pos[None, :] + shifts                           # (K, Nt)
    tap_mask = ((tap_pos >= 0) & (tap_pos < L)).astype(x.dtype)
    tap_mask = jnp.pad(tap_mask, ((0, 0), (0, Nt_pad - Nt)))       # (K, Nt_pad)
    tap_mask = tap_mask.reshape(K, 1, Nt_pad)

    out = pl.pallas_call(
        functools.partial(_conv1d_relu_kernel, K=K, pad=pad, use_mask=use_mask),
        out_shape=jax.ShapeDtypeStruct((G, Cout_p, Nt_pad), x.dtype),
        grid_spec=pltpu.PrefetchScalarGridSpec(
            num_scalar_prefetch=0,
            grid=(G,),
            in_specs=[
                pl.BlockSpec((1, Cin_p, Ntp), lambda g: (g, 0, 0)),
                pl.BlockSpec((Cout_p, K * Cin_p), lambda g: (0, 0)),
                pl.BlockSpec((K, 1, Nt_pad), lambda g: (0, 0, 0)),
            ],
            out_specs=pl.BlockSpec((1, Cout_p, Nt_pad), lambda g: (g, 0, 0)),
        ),
        compiler_params=pltpu.CompilerParams(
            dimension_semantics=("parallel",),
        ),
    )(xs, wf, tap_mask)

    # Back to PyTorch NCL layout: (G, Cout_p, Nt_pad) -> (B, Cout, L).
    out = out[:, :, :Nt].reshape(G, Cout_p, Bt, L)
    out = out.transpose(0, 2, 1, 3).reshape(B, Cout_p, L)
    return out[:, :Cout, :]


if __name__ == "__main__":
    key = jax.random.PRNGKey(0)
    k_x, k_w = jax.random.split(key)

    # Small shapes consistent with CNNSEBlock(in_planes=4, planes=8)
    B, Cin, Cout, L, K = 2, 4, 8, 16, 3
    x = jax.random.normal(k_x, (B, Cin, L), dtype=jnp.float32)
    weight = jax.random.normal(k_w, (Cout, Cin, K), dtype=jnp.float32) * 0.1

    out = cnn_se_block_forward(x, weight, padding=1)
    out = jax.block_until_ready(out)

    # Reference: NCL conv1d + ReLU.
    ref = jax.lax.conv_general_dilated(
        x, weight, window_strides=(1,), padding=[(1, 1)],
        dimension_numbers=("NCH", "OIH", "NCH"),
    )
    ref = jnp.maximum(ref, 0.0)
    assert out.shape == (B, Cout, L)
    assert jnp.allclose(out, ref, atol=1e-5, rtol=1e-5)

    print("KERNEL_OK")
</pallas_src>

<mosaic_0001>
module attributes {stable_mosaic.version = 11 : i64} {
  func.func @_conv1d_relu_kernel(%arg0: i32, %arg1: memref<1x8x130xf32, #tpu.memory_space<vmem>>, %arg2: memref<8x24xf32, #tpu.memory_space<vmem>>, %arg3: memref<3x1x128xf32, #tpu.memory_space<vmem>>, %arg4: memref<1x8x128xf32, #tpu.memory_space<vmem>>) attributes {dimension_semantics = [#tpu.dimension_semantics<parallel>], iteration_bounds = array<i64: 1>, scalar_prefetch = 0 : i64, scratch_operands = 0 : i64, tpu.core_type = #tpu.core_type<tc>, window_params = [{transform_indices = @transform_0, window_bounds = array<i64: 1, 8, 130>}, {pipeline_mode = #tpu.pipeline_mode<synchronous>, transform_indices = @transform_1, window_bounds = array<i64: 8, 24>}, {pipeline_mode = #tpu.pipeline_mode<synchronous>, transform_indices = @transform_2, window_bounds = array<i64: 3, 1, 128>}, {transform_indices = @transform_3, window_bounds = array<i64: 1, 8, 128>}]} {
    %c0 = arith.constant 0 : index
    %c0_0 = arith.constant 0 : index
    %c0_1 = arith.constant 0 : index
    %0 = vector.load %arg1[%c0, %c0_0, %c0_1] : memref<1x8x130xf32, #tpu.memory_space<vmem>>, vector<1x8x130xf32>
    %1 = vector.shape_cast %0 : vector<1x8x130xf32> to vector<8x130xf32>
    %2 = vector.extract_strided_slice %1 {offsets = [0, 0], sizes = [8, 128], strides = [1, 1]} : vector<8x130xf32> to vector<8x128xf32>
    %c0_2 = arith.constant 0 : index
    %c0_3 = arith.constant 0 : index
    %c0_4 = arith.constant 0 : index
    %3 = vector.load %arg3[%c0_2, %c0_3, %c0_4] : memref<3x1x128xf32, #tpu.memory_space<vmem>>, vector<1x1x128xf32>
    %4 = vector.shape_cast %3 : vector<1x1x128xf32> to vector<1x128xf32>
    %5 = vector.broadcast %4 : vector<1x128xf32> to vector<8x128xf32>
    %6 = arith.mulf %2, %5 : vector<8x128xf32>
    %7 = vector.extract_strided_slice %1 {offsets = [0, 1], sizes = [8, 128], strides = [1, 1]} : vector<8x130xf32> to vector<8x128xf32>
    %8 = vector.extract_strided_slice %1 {offsets = [0, 2], sizes = [8, 128], strides = [1, 1]} : vector<8x130xf32> to vector<8x128xf32>
    %c2 = arith.constant 2 : index
    %c0_5 = arith.constant 0 : index
    %c0_6 = arith.constant 0 : index
    %9 = vector.load %arg3[%c2, %c0_5, %c0_6] : memref<3x1x128xf32, #tpu.memory_space<vmem>>, vector<1x1x128xf32>
    %10 = vector.shape_cast %9 : vector<1x1x128xf32> to vector<1x128xf32>
    %11 = vector.broadcast %10 : vector<1x128xf32> to vector<8x128xf32>
    %12 = arith.mulf %8, %11 : vector<8x128xf32>
    %13 = tpu.concatenate %6, %7, %12 in 0 : vector<8x128xf32>, vector<8x128xf32>, vector<8x128xf32> -> vector<24x128xf32>
    %c0_7 = arith.constant 0 : index
    %c0_8 = arith.constant 0 : index
    %14 = vector.load %arg2[%c0_7, %c0_8] : memref<8x24xf32, #tpu.memory_space<vmem>>, vector<8x24xf32>
    %cst = arith.constant dense<0.000000e+00> : vector<8x128xf32>
    %15 = tpu.matmul %14, %13, %cst {dimension_numbers = #tpu.dot_dimension_numbers<[1], [0], [0], [1], [0, 0, 1, 1], [], []>} : vector<8x24xf32>, vector<24x128xf32>, vector<8x128xf32> -> vector<8x128xf32>
    %cst_9 = arith.constant 0.000000e+00 : f32
    %16 = vector.broadcast %cst_9 : f32 to vector<8x128xf32>
    %17 = arith.maximumf %15, %16 : vector<8x128xf32>
    %c0_10 = arith.constant 0 : index
    %c0_11 = arith.constant 0 : index
    %c0_12 = arith.constant 0 : index
    %18 = vector.load %arg4[%c0_10, %c0_11, %c0_12] : memref<1x8x128xf32, #tpu.memory_space<vmem>>, vector<1x8x128xf32>
    %19 = vector.shape_cast %18 : vector<1x8x128xf32> to vector<8x128xf32>
    %20 = vector.shape_cast %17 : vector<8x128xf32> to vector<1x8x128xf32>
    tpu.vector_store %arg4[%c0_10, %c0_11, %c0_12], %20 {strides = array<i32>} : memref<1x8x128xf32, #tpu.memory_space<vmem>>, vector<1x8x128xf32>,
    return
  }
  func.func @transform_0(%arg0: i32) -> (i32, i32, i32) {
    %c0_i32 = arith.constant 0 : i32
    %c0_i32_0 = arith.constant 0 : i32
    %c0_i32_1 = arith.constant 0 : i32
    return %arg0, %c0_i32, %c0_i32_0 : i32, i32, i32
  }
  func.func @transform_1(%arg0: i32) -> (i32, i32) {
    %c0_i32 = arith.constant 0 : i32
    %c0_i32_0 = arith.constant 0 : i32
    %c0_i32_1 = arith.constant 0 : i32
    return %c0_i32, %c0_i32_0 : i32, i32
  }
  func.func @transform_2(%arg0: i32) -> (i32, i32, i32) {
    %c0_i32 = arith.constant 0 : i32
    %c0_i32_0 = arith.constant 0 : i32
    %c0_i32_1 = arith.constant 0 : i32
    %c0_i32_2 = arith.constant 0 : i32
    return %c0_i32, %c0_i32_0, %c0_i32_1 : i32, i32, i32
  }
  func.func @transform_3(%arg0: i32) -> (i32, i32, i32) {
    %c0_i32 = arith.constant 0 : i32
    %c0_i32_0 = arith.constant 0 : i32
    %c0_i32_1 = arith.constant 0 : i32
    return %arg0, %c0_i32, %c0_i32_0 : i32, i32, i32
  }
}

</mosaic_0001>

<llo_original>
// kernel: tpu_custom_call.1
$region0: #{tpu_custom_call.1}
  #allocation0 [shape = 'u32[]', space=smem, size = 0x4, offset = 0x4, fixed_abs, tag = 'smem constant byte address 0x4 - core index']
  #allocation1 [shape = 'u32[72,128]{1,0:T(1,128)}', space=vmem, size = 0x9000, scoped, tag = 'internal scratch']
  %s0 = inlined_call_operand.hbm [shape: f32[1,8,130], index: 0, kind: input, shape index: {}]
  %s1 = inlined_call_operand.hbm [shape: f32[8,24], index: 1, kind: input, shape index: {}]
  %s2 = inlined_call_operand.hbm [shape: f32[3,1,128], index: 2, kind: input, shape index: {}]
  %s3 = inlined_call_operand.hbm [shape: f32[1,8,128], index: 3, kind: output, shape index: {}]
  %s4 = sld [smem:[#allocation0]]
  $region34: #{tpu_custom_call.1} parent=0
    _
  %s6 = ssub.s32 1, %s4
  %s7 = scalar_select 0, %s6, %s4
  $region1: #{tpu_custom_call.1} parent=0
    #allocation2 [shape = 'u8[8192]{0}', space=vmem, size = 0x2000, scoped, tag = 'input window, operand 0, single buffered']
    #allocation3 [shape = 's32[1]{0}', space=sflag, size = 0x4, scoped, tag = 'scoped memory for tpu_custom_call.1']
    #allocation4 [shape = 's32[1]{0}', space=sflag, size = 0x4, scoped, tag = 'scoped memory for tpu_custom_call.1']
    #allocation5 [shape = 'u8[4096]{0}', space=vmem, size = 0x1000, scoped, tag = 'input window, operand 1, single buffered']
    #allocation6 [shape = 's32[1]{0}', space=sflag, size = 0x4, scoped, tag = 'scoped memory for tpu_custom_call.1']
    #allocation7 [shape = 'u8[1536]{0}', space=vmem, size = 0x800, scoped, tag = 'input window, operand 2, single buffered']
    #allocation8 [shape = 'u8[4096]{0}', space=vmem, size = 0x1000, scoped, tag = 'output window, operand 0, single buffered']
    %8 = vsyncpa [#allocation3], 0
    %9 = vsyncpa [#allocation6], 0
    %10 = vsyncpa [#allocation4], 0
    // Predicated region
    $region2: #{tpu_custom_call.1} parent=1 // pred_check
      _
    $region3: #{tpu_custom_call.1} parent=1 // pred_check_branch
      %12 = sbr.rel (0) target = $region5
    $region4: #{tpu_custom_call.1} parent=1 // pred_region
      %14 = vsyncadd [#allocation3], 0
      %s16 = sshll.u32 %s0, 4
      %s17 = int_to_ptr.hbm [resolvable:$true] %s16
      %s18 = sshll.u32 [#allocation2], 4
      %s19 = int_to_ptr.vmem [resolvable:$true] %s18
      %21 = dma.hbm_to_vmem [thread:$0]  %s17, 256, %s19, [#allocation3]
    $region5: #{tpu_custom_call.1} parent=1 // pred_fallthru
      _
    // Predicated region
    $region6: #{tpu_custom_call.1} parent=1 // pred_check
      _
    $region7: #{tpu_custom_call.1} parent=1 // pred_check_branch
      %23 = sbr.rel (0) target = $region9
    $region8: #{tpu_custom_call.1} parent=1 // pred_region
      %25 = vsyncadd [#allocation6], 0
      %s27 = sshll.u32 %s1, 4
      %s28 = int_to_ptr.hbm [resolvable:$true] %s27
      %s29 = sshll.u32 [#allocation5], 4
      %s30 = int_to_ptr.vmem [resolvable:$true] %s29
      %32 = dma.hbm_to_vmem [thread:$0]  %s28, 128, %s30, [#allocation6]
    $region9: #{tpu_custom_call.1} parent=1 // pred_fallthru
      _
    // Predicated region
    $region10: #{tpu_custom_call.1} parent=1 // pred_check
      _
    $region11: #{tpu_custom_call.1} parent=1 // pred_check_branch
      %34 = sbr.rel (0) target = $region13
    $region12: #{tpu_custom_call.1} parent=1 // pred_region
      %36 = vsyncadd [#allocation6], 0
      %s37 = sshll.u32 %s2, 4
      %s38 = int_to_ptr.hbm [resolvable:$true] %s37
      %s39 = sshll.u32 [#allocation7], 4
      %s40 = int_to_ptr.vmem [resolvable:$true] %s39
      %45 = dma.hbm_to_vmem [thread:$0]  %s38, 48, %s40, [#allocation6], 16, 16, 1
    $region13: #{tpu_custom_call.1} parent=1 // pred_fallthru
      _
    // Predicated region
    $region14: #{tpu_custom_call.1} parent=1 // pred_check
      _
    $region15: #{tpu_custom_call.1} parent=1 // pred_check_branch
      %47 = sbr.rel (0) target = $region17
    $region16: #{tpu_custom_call.1} parent=1 // pred_region
      %49 = dma.done [#allocation3], 256
    $region17: #{tpu_custom_call.1} parent=1 // pred_fallthru
      _
    // Predicated region
    $region18: #{tpu_custom_call.1} parent=1 // pred_check
      _
    $region19: #{tpu_custom_call.1} parent=1 // pred_check_branch
      %51 = sbr.rel (0) target = $region21
    $region20: #{tpu_custom_call.1} parent=1 // pred_region
      %53 = dma.done [#allocation6], 128
    $region21: #{tpu_custom_call.1} parent=1 // pred_fallthru
      _
    // Predicated region
    $region22: #{tpu_custom_call.1} parent=1 // pred_check
      _
    $region23: #{tpu_custom_call.1} parent=1 // pred_check_branch
      %55 = sbr.rel (0) target = $region25
    $region24: #{tpu_custom_call.1} parent=1 // pred_region
      %57 = dma.done [#allocation6], 48
    $region25: #{tpu_custom_call.1} parent=1 // pred_fallthru
      _
    %v58 = vld [vmem:[#allocation2] sm:$0xff]
    %v59 = vld [vmem:[#allocation2 + $0x8] sm:$0xff]
    %v60 = vld [vmem:[#allocation7] sm:$0x1]
    %v62 = vperm.slane %v60, 0
    %v64 = vmul.f32 %v58, %v62
    %s65 = scalar_lea.vmem [#allocation7], 2
    %v66 = vld [vmem:[%s65] sm:$0x1]
    %v68 = vperm.slane %v66, 0
    %69 = vrot.lane.b32.xlu0 %v68, 2
    %v70 = vpop.permute.xlu0 %69
    %v72 = vmul.f32 %v58, %v70
    %v73 = vmul.f32 %v59, %v70
    %76 = vrot.lane.b32.xlu0 %v58, 127
    %v77 = vpop.permute.xlu0 %76
    %78 = vrot.lane.b32.xlu0 %v59, 127
    %v79 = vpop.permute.xlu0 %78
    %vm80 = vcmask 1039360
    %v81 = vsel %vm80, %v77, %v79
    %85 = vrot.lane.b32.xlu0 %v72, 126
    %v86 = vpop.permute.xlu0 %85
    %87 = vrot.lane.b32.xlu0 %v73, 126
    %v88 = vpop.permute.xlu0 %87
    %vm89 = vcmask 1031168
    %v90 = vsel %vm89, %v86, %v88
    %v92 = vld [vmem:[#allocation5] sm:$0xff]
    %vm93 = vcmask 195584
    %v95 = vsel %vm93, %v92, 0
    %97 = vmatpush.msra.mxu0 0.0
    %98 = vmatpush.msra.mxu0 0.0
    %99 = vmatpush.msra.mxu0 0.0
    %100 = vmatpush.msra.mxu0 0.0
    %101 = vmatpush.msra.mxu0 0.0
    %102 = vmatpush.msra.mxu0 0.0
    %103 = vmatpush.msra.mxu0 0.0
    %104 = vmatpush.msra.mxu0 0.0
    %105 = vmatpush.msra.mxu0 0.0
    %106 = vmatpush.msra.mxu0 0.0
    %107 = vmatpush.msra.mxu0 0.0
    %108 = vmatpush.msra.mxu0 0.0
    %109 = vmatpush.msra.mxu0 0.0
    %110 = vmatpush.msra.mxu0 %v90
    %111 = vmatpush.msra.mxu0 %v81
    %112 = vmatpush.msra.mxu0 %v64
    %113 = vmatmul.f32.gmra.mxu0 %v95
    %v114 = vpop.f32.mrf.mxu0
    %v115 = vadd.f32 0.0, %v114
    %116 = vdwg.mxu0
    %v117 = vmax.f32 %v115, 0.0
    %118 = vst [vmem:[#allocation8] sm:$0xff] %v117
    // Predicated region
    $region26: #{tpu_custom_call.1} parent=1 // pred_check
      _
    $region27: #{tpu_custom_call.1} parent=1 // pred_check_branch
      %120 = sbr.rel (0) target = $region29
    $region28: #{tpu_custom_call.1} parent=1 // pred_region
      %122 = vsyncadd [#allocation4], 0
      %s124 = sshll.u32 [#allocation8], 4
      %s125 = int_to_ptr.vmem [resolvable:$true] %s124
      %s126 = sshll.u32 %s3, 4
      %s127 = int_to_ptr.hbm [resolvable:$true] %s126
      %129 = dma.vmem_to_hbm [thread:$0]  %s125, 128, %s127, [#allocation4]
    $region29: #{tpu_custom_call.1} parent=1 // pred_fallthru
      _
    // Predicated region
    $region30: #{tpu_custom_call.1} parent=1 // pred_check
      _
    $region31: #{tpu_custom_call.1} parent=1 // pred_check_branch
      %131 = sbr.rel (0) target = $region33
    $region32: #{tpu_custom_call.1} parent=1 // pred_region
      %133 = dma.done [#allocation4], 128
    $region33: #{tpu_custom_call.1} parent=1 // pred_fallthru
      _
    %134 = vsyncpa [#allocation3], 1
    %135 = vsyncpa [#allocation6], 1
    %136 = vsyncpa [#allocation4], 1

</llo_original>
